<compile_context>
chip_gen: v7x
topology: tpu7x:2x2x1
jax: 0.10.0
libtpu: 0.0.40
codegen_flags: <defaults>
</compile_context>

<pallas_src>
import functools
import math

import jax
import jax.numpy as jnp
from jax.experimental import pallas as pl
from jax.experimental.pallas import tpu as pltpu

EPS = 1e-32  # module default; representable in float32


def _sublane_multiple(dtype):
    # 8 rows/sublane-tile for 4-byte dtypes, 16 for bf16, 32 for int8/fp8.
    itemsize = jnp.dtype(dtype).itemsize
    return max(8, 32 // max(itemsize, 1))


def _pick_chunk_c(c, max_chunk=1024):
    """Class-axis chunk width: full C when small, else a 128-multiple divisor."""
    if c <= max_chunk:
        return c
    for cc in range(max_chunk, 127, -128):
        if c % cc == 0:
            return cc
    # TODO(synk): masked ragged class chunk for C with no 128-multiple divisor;
    # fall back to a single full-width sweep (correct, just VMEM-heavier).
    return c


def _pick_block_rows(n, c, itemsize, sublane, target_bytes=8 << 20, max_rows=2048):
    """Largest row tile (sublane multiple, capped) with ~target_bytes of logits."""
    tn = target_bytes // max(c * itemsize, 1)
    tn = max(sublane, min(max_rows, tn))
    tn = (tn // sublane) * sublane
    if tn >= n:
        # Whole batch fits in one tile; prefer splitting into >= 2 grid steps so
        # the "parallel" axis has work for both TensorCores on megacore chips.
        half = ((n + 1) // 2 + sublane - 1) // sublane * sublane
        if sublane < n and half < n:
            tn = half
        else:
            tn = n
    return tn


def _ce_kernel(x_ref, y_ref, out_ref, *, n_total, block_rows, chunk_c,
               num_chunks, log_eps):
    # x_ref: (tn, C) logits (native dtype), y_ref: (tn, 1) i32 targets,
    # out_ref: (8, 128) f32 partial-sum tile owned by this grid step.
    i = pl.program_id(0)
    tn = block_rows
    y = y_ref[...]                                              # (tn, 1) int32

    # Lane iota for one chunk, computed once (chunk-sized, not tile-sized).
    lane = jax.lax.broadcasted_iota(jnp.int32, (tn, chunk_c), 1)

    def process(start, carry):
        """One class chunk: online max / sum-exp + target-logit pick."""
        m, s, t = carry
        xc = x_ref[:, pl.ds(start, chunk_c)]                    # native dtype
        # Chunk max in native dtype (exact), upcast only the scalar-per-row.
        cm = jnp.max(xc, axis=-1, keepdims=True).astype(jnp.float32)
        m_new = jnp.maximum(m, cm)
        p = jnp.exp(xc.astype(jnp.float32) - m_new)             # (tn, chunk_c) f32
        s = s * jnp.exp(m - m_new) + jnp.sum(p, axis=-1, keepdims=True)
        # Target-logit extraction folded into the same pass (native dtype,
        # exact: only zeros are added).
        hit = lane == (y - start)
        picked = jnp.where(hit, xc, jnp.zeros_like(xc))
        t = t + jnp.sum(picked, axis=-1, keepdims=True).astype(jnp.float32)
        return m_new, s, t

    init = (jnp.full((tn, 1), -jnp.inf, jnp.float32),
            jnp.zeros((tn, 1), jnp.float32),
            jnp.zeros((tn, 1), jnp.float32))

    if num_chunks <= 8:
        # Short fixed trip count: static starts, fully unrolled at trace time.
        carry = init
        for k in range(num_chunks):
            carry = process(k * chunk_c, carry)
        m, s, t = carry
    else:
        # Vocab-scale C: chunk_c is a 128-multiple, keep the loop rolled.
        def body(k, carry):
            return process(pl.multiple_of(k * chunk_c, 128), carry)
        m, s, t = jax.lax.fori_loop(0, num_chunks, body, init)

    # log(max(softmax(x)[y], eps)) == max(x_y - logsumexp(x), log(eps))
    lse = m + jnp.log(s)                                        # (tn, 1)
    logp = jnp.maximum(t - lse, jnp.float32(log_eps))           # (tn, 1)

    # Mask rows past the true batch size (ragged last tile contributes 0).
    row = jax.lax.broadcasted_iota(jnp.int32, (tn, 1), 0) + i * block_rows
    partial = -jnp.sum(jnp.where(row < n_total, logp, 0.0))

    # Single unmasked store of this block's lane-aligned partial-sum tile.
    r8 = jax.lax.broadcasted_iota(jnp.int32, (8, 128), 0)
    c128 = jax.lax.broadcasted_iota(jnp.int32, (8, 128), 1)
    out_ref[...] = jnp.where((r8 == 0) & (c128 == 0), partial, jnp.float32(0.0))


def cross_entropy_loss(x, y, *, eps=EPS, block_rows=None, chunk_c=None):
    """x: (N, C) logits (any float dtype), y: (N,) int labels -> scalar f32 loss."""
    n, c = x.shape
    y2d = y.astype(jnp.int32).reshape(n, 1)
    itemsize = jnp.dtype(x.dtype).itemsize
    sublane = _sublane_multiple(x.dtype)

    if block_rows is None:
        tn = _pick_block_rows(n, c, itemsize, sublane)
    else:
        tn = max(sublane, (min(block_rows, n) // sublane) * sublane)
        if tn >= n:
            tn = n
    grid = pl.cdiv(n, tn)

    if chunk_c is None or c % chunk_c != 0 or \
            (c // chunk_c > 8 and chunk_c % 128 != 0):
        chunk_c = _pick_chunk_c(c)
    num_chunks = c // chunk_c

    log_eps = math.log(eps)
    kernel = functools.partial(
        _ce_kernel, n_total=n, block_rows=tn, chunk_c=chunk_c,
        num_chunks=num_chunks, log_eps=log_eps)

    # VMEM budget: double-buffered logits blocks + targets + output tiles +
    # chunk-sized f32 temporaries, with headroom (safe on v5e/v6e/v7x).
    vmem_bytes = 2 * tn * c * itemsize           # logits, double-buffered
    vmem_bytes += 2 * tn * 4 + 2 * 8 * 128 * 4   # targets + out tiles
    vmem_bytes += 6 * tn * chunk_c * 4           # chunk f32 temporaries (generous)
    vmem_limit = int(min(48 << 20, max(vmem_bytes + (4 << 20), 16 << 20)))

    cost = pl.CostEstimate(
        flops=5 * n * c,
        transcendentals=n * c,
        bytes_accessed=n * c * itemsize + n * 4 + grid * 8 * 128 * 4,
    )

    partials = pl.pallas_call(
        kernel,
        out_shape=jax.ShapeDtypeStruct((8, grid * 128), jnp.float32),
        grid=(grid,),
        in_specs=[
            pl.BlockSpec((tn, c), lambda i: (i, 0)),   # logits, native dtype
            pl.BlockSpec((tn, 1), lambda i: (i, 0)),   # int32 targets
        ],
        out_specs=pl.BlockSpec((8, 128), lambda i: (0, i)),
        compiler_params=pltpu.CompilerParams(
            dimension_semantics=("parallel",),
            vmem_limit_bytes=vmem_limit,
        ),
        cost_estimate=cost,
    )(x, y2d)

    # Mean over the true batch size (masked rows contributed 0).
    return jnp.sum(partials) / jnp.float32(n)


def cross_entropy_loss_ref(x, y, eps=EPS):
    # Pure-JAX reference of the PyTorch forward.
    p = jax.nn.softmax(x.astype(jnp.float32), axis=-1)
    logp = jnp.log(jnp.maximum(p, jnp.float32(eps)))
    picked = jnp.take_along_axis(logp, y.astype(jnp.int32)[:, None], axis=-1)[:, 0]
    return -jnp.mean(picked)


if __name__ == "__main__":
    key = jax.random.PRNGKey(0)
    kx, ky, kx2, ky2, kx3, ky3, kx4, ky4 = jax.random.split(key, 8)

    # Small case (single block, full-array tiles).
    N, C = 8, 32
    x = jax.random.normal(kx, (N, C), dtype=jnp.float32)
    y = jax.random.randint(ky, (N,), 0, C, dtype=jnp.int32)
    loss = jax.block_until_ready(cross_entropy_loss(x, y))
    ref = jax.block_until_ready(cross_entropy_loss_ref(x, y))
    assert jnp.allclose(loss, ref, rtol=1e-5, atol=1e-5), (loss, ref)

    # Multi-block case with a ragged last row tile (grid + batch masking).
    N2, C2 = 40, 128
    x2 = jax.random.normal(kx2, (N2, C2), dtype=jnp.float32)
    y2 = jax.random.randint(ky2, (N2,), 0, C2, dtype=jnp.int32)
    loss2 = jax.block_until_ready(cross_entropy_loss(x2, y2, block_rows=16))
    ref2 = jax.block_until_ready(cross_entropy_loss_ref(x2, y2))
    assert jnp.allclose(loss2, ref2, rtol=1e-5, atol=1e-5), (loss2, ref2)

    # Chunked class axis: online LSE over two 128-wide chunks.
    N3, C3 = 24, 256
    x3 = jax.random.normal(kx3, (N3, C3), dtype=jnp.float32) * 4.0
    y3 = jax.random.randint(ky3, (N3,), 0, C3, dtype=jnp.int32)
    loss3 = jax.block_until_ready(cross_entropy_loss(x3, y3, chunk_c=128))
    ref3 = jax.block_until_ready(cross_entropy_loss_ref(x3, y3))
    assert jnp.allclose(loss3, ref3, rtol=1e-5, atol=1e-5), (loss3, ref3)

    # bf16 logits: native-dtype DMA and compute, f32 only inside exp/accumulate.
    N4, C4 = 32, 64
    x4 = jax.random.normal(kx4, (N4, C4), dtype=jnp.float32).astype(jnp.bfloat16)
    y4 = jax.random.randint(ky4, (N4,), 0, C4, dtype=jnp.int32)
    loss4 = jax.block_until_ready(cross_entropy_loss(x4, y4))
    ref4 = jax.block_until_ready(cross_entropy_loss_ref(x4, y4))
    assert jnp.allclose(loss4, ref4, rtol=1e-4, atol=1e-4), (loss4, ref4)

    print("KERNEL_OK")
</pallas_src>

<mosaic_0001>
module attributes {stable_mosaic.version = 11 : i64} {
  func.func @_ce_kernel(%arg0: i32, %arg1: memref<8x32xf32, #tpu.memory_space<vmem>>, %arg2: memref<8x1xi32, #tpu.memory_space<vmem>>, %arg3: memref<8x128xf32, #tpu.memory_space<vmem>>) attributes {dimension_semantics = [#tpu.dimension_semantics<parallel>], iteration_bounds = array<i64: 1>, scalar_prefetch = 0 : i64, scratch_operands = 0 : i64, tpu.core_type = #tpu.core_type<tc>, window_params = [{transform_indices = @transform_0, window_bounds = array<i64: 8, 32>}, {transform_indices = @transform_1, window_bounds = array<i64: 8, 1>}, {transform_indices = @transform_2, window_bounds = array<i64: 8, 128>}]} {
    %c0 = arith.constant 0 : index
    %c0_0 = arith.constant 0 : index
    %0 = vector.load %arg2[%c0, %c0_0] : memref<8x1xi32, #tpu.memory_space<vmem>>, vector<8x1xi32>
    %1 = tpu.iota {dimensions = array<i32: 1>} : vector<8x32xi32>
    %cst = arith.constant 0xFF800000 : f32
    %2 = vector.broadcast %cst : f32 to vector<8x1xf32>
    %cst_1 = arith.constant 0.000000e+00 : f32
    %3 = vector.broadcast %cst_1 : f32 to vector<8x1xf32>
    %cst_2 = arith.constant 0.000000e+00 : f32
    %4 = vector.broadcast %cst_2 : f32 to vector<8x1xf32>
    %c0_3 = arith.constant 0 : index
    %c0_4 = arith.constant 0 : index
    %5 = vector.load %arg1[%c0_3, %c0_4] : memref<8x32xf32, #tpu.memory_space<vmem>>, vector<8x32xf32>
    %cst_5 = arith.constant dense<0xFF800000> : vector<8xf32>
    %6 = vector.multi_reduction <maximumf>, %5, %cst_5 [1] : vector<8x32xf32> to vector<8xf32>
    %7 = vector.shape_cast %6 : vector<8xf32> to vector<8x1xf32>
    %8 = arith.maximumf %2, %7 : vector<8x1xf32>
    %9 = vector.broadcast %8 : vector<8x1xf32> to vector<8x32xf32>
    %10 = arith.subf %5, %9 : vector<8x32xf32>
    %11 = math.exp %10 : vector<8x32xf32>
    %12 = arith.subf %2, %8 : vector<8x1xf32>
    %13 = math.exp %12 : vector<8x1xf32>
    %14 = arith.mulf %3, %13 : vector<8x1xf32>
    %cst_6 = arith.constant dense<0.000000e+00> : vector<8xf32>
    %15 = vector.multi_reduction <add>, %11, %cst_6 [1] : vector<8x32xf32> to vector<8xf32>
    %16 = vector.shape_cast %15 : vector<8xf32> to vector<8x1xf32>
    %17 = arith.addf %14, %16 : vector<8x1xf32>
    %c0_i32 = arith.constant 0 : i32
    %18 = vector.broadcast %c0_i32 : i32 to vector<8x1xi32>
    %19 = arith.subi %0, %18 : vector<8x1xi32>
    %20 = vector.broadcast %19 : vector<8x1xi32> to vector<8x32xi32>
    %21 = arith.cmpi eq, %1, %20 : vector<8x32xi32>
    %cst_7 = arith.constant 0.000000e+00 : f32
    %22 = vector.broadcast %cst_7 : f32 to vector<8x32xf32>
    %23 = arith.select %21, %5, %22 : vector<8x32xi1>, vector<8x32xf32>
    %cst_8 = arith.constant dense<0.000000e+00> : vector<8xf32>
    %24 = vector.multi_reduction <add>, %23, %cst_8 [1] : vector<8x32xf32> to vector<8xf32>
    %25 = vector.shape_cast %24 : vector<8xf32> to vector<8x1xf32>
    %26 = arith.addf %4, %25 : vector<8x1xf32>
    %27 = math.log %17 : vector<8x1xf32>
    %28 = arith.addf %8, %27 : vector<8x1xf32>
    %29 = arith.subf %26, %28 : vector<8x1xf32>
    %cst_9 = arith.constant -73.6827239 : f32
    %30 = vector.broadcast %cst_9 : f32 to vector<8x1xf32>
    %31 = arith.maximumf %29, %30 : vector<8x1xf32>
    %32 = tpu.iota {dimensions = array<i32: 0>} : vector<8x1xi32>
    %c8_i32 = arith.constant 8 : i32
    %33 = arith.muli %arg0, %c8_i32 : i32
    %34 = vector.broadcast %33 : i32 to vector<8x1xi32>
    %35 = arith.addi %32, %34 : vector<8x1xi32>
    %c8_i32_10 = arith.constant 8 : i32
    %36 = vector.broadcast %c8_i32_10 : i32 to vector<8x1xi32>
    %37 = arith.cmpi slt, %35, %36 : vector<8x1xi32>
    %cst_11 = arith.constant 0.000000e+00 : f32
    %38 = vector.broadcast %cst_11 : f32 to vector<8x1xf32>
    %39 = arith.select %37, %31, %38 : vector<8x1xi1>, vector<8x1xf32>
    %40 = vector.shape_cast %39 : vector<8x1xf32> to vector<1x8x1xf32>
    %cst_12 = arith.constant dense<0.000000e+00> : vector<1xf32>
    %41 = vector.multi_reduction <add>, %40, %cst_12 [1, 2] : vector<1x8x1xf32> to vector<1xf32>
    %42 = vector.shape_cast %41 : vector<1xf32> to vector<1x1x1xf32>
    %43 = vector.extract %42[0, 0, 0] : f32 from vector<1x1x1xf32>
    %cst_13 = arith.constant 0.000000e+00 : f32
    %44 = arith.subf %cst_13, %43 : f32
    %45 = tpu.iota {dimensions = array<i32: 0>} : vector<8x128xi32>
    %46 = tpu.iota {dimensions = array<i32: 1>} : vector<8x128xi32>
    %c0_i32_14 = arith.constant 0 : i32
    %47 = vector.broadcast %c0_i32_14 : i32 to vector<8x128xi32>
    %48 = arith.cmpi eq, %45, %47 : vector<8x128xi32>
    %c0_i32_15 = arith.constant 0 : i32
    %49 = vector.broadcast %c0_i32_15 : i32 to vector<8x128xi32>
    %50 = arith.cmpi eq, %46, %49 : vector<8x128xi32>
    %51 = arith.andi %48, %50 : vector<8x128xi1>
    %cst_16 = arith.constant 0.000000e+00 : f32
    %52 = vector.broadcast %44 : f32 to vector<8x128xf32>
    %53 = vector.broadcast %cst_16 : f32 to vector<8x128xf32>
    %54 = arith.select %51, %52, %53 : vector<8x128xi1>, vector<8x128xf32>
    %c0_17 = arith.constant 0 : index
    %c0_18 = arith.constant 0 : index
    %55 = vector.load %arg3[%c0_17, %c0_18] : memref<8x128xf32, #tpu.memory_space<vmem>>, vector<8x128xf32>
    tpu.vector_store %arg3[%c0_17, %c0_18], %54 {strides = array<i32>} : memref<8x128xf32, #tpu.memory_space<vmem>>, vector<8x128xf32>,
    return
  }
  func.func @transform_0(%arg0: i32) -> (i32, i32) {
    %c0_i32 = arith.constant 0 : i32
    %c0_i32_0 = arith.constant 0 : i32
    return %arg0, %c0_i32 : i32, i32
  }
  func.func @transform_1(%arg0: i32) -> (i32, i32) {
    %c0_i32 = arith.constant 0 : i32
    %c0_i32_0 = arith.constant 0 : i32
    return %arg0, %c0_i32 : i32, i32
  }
  func.func @transform_2(%arg0: i32) -> (i32, i32) {
    %c0_i32 = arith.constant 0 : i32
    %c0_i32_0 = arith.constant 0 : i32
    return %c0_i32, %arg0 : i32, i32
  }
}

</mosaic_0001>

<llo_original>
// kernel: tpu_custom_call.1
$region0: #{tpu_custom_call.1}
  #allocation0 [shape = 'u32[]', space=smem, size = 0x4, offset = 0x4, fixed_abs, tag = 'smem constant byte address 0x4 - core index']
  #allocation1 [shape = 'u32[144,128]{1,0:T(1,128)}', space=vmem, size = 0x12000, scoped, tag = 'internal scratch']
  %s0 = inlined_call_operand.vmem [shape: f32[8,32], index: 0, kind: input, shape index: {}]
  %s1 = inlined_call_operand.vmem [shape: s32[8,1], index: 1, kind: input, shape index: {}]
  %s2 = inlined_call_operand.hbm [shape: f32[8,128], index: 2, kind: output, shape index: {}]
  %s3 = sld [smem:[#allocation0]]
  $region18: #{tpu_custom_call.1} parent=0
    _
  %s5 = ssub.s32 1, %s3
  %s6 = scalar_select 0, %s5, %s3
  $region1: #{tpu_custom_call.1} parent=0
    #allocation2 [shape = 'u8[4096]{0}', space=vmem, size = 0x1000, scoped, tag = 'output window, operand 0, single buffered']
    #allocation3 [shape = 's32[1]{0}', space=sflag, size = 0x4, scoped, tag = 'scoped memory for tpu_custom_call.1']
    %7 = vsyncpa [#allocation3], 0
    // Predicated region
    $region2: #{tpu_custom_call.1} parent=1 // pred_check
      _
    $region3: #{tpu_custom_call.1} parent=1 // pred_check_branch
      %9 = sbr.rel (0) target = $region5
    $region4: #{tpu_custom_call.1} parent=1 // pred_region
      _
    $region5: #{tpu_custom_call.1} parent=1 // pred_fallthru
      _
    // Predicated region
    $region6: #{tpu_custom_call.1} parent=1 // pred_check
      _
    $region7: #{tpu_custom_call.1} parent=1 // pred_check_branch
      %11 = sbr.rel (0) target = $region9
    $region8: #{tpu_custom_call.1} parent=1 // pred_region
      _
    $region9: #{tpu_custom_call.1} parent=1 // pred_fallthru
      _
    %v12 = vld [vmem:[%s1] sm:$0xff]
    %v13 = vlaneseq
    %v14 = vand.u32 %v13, 127
    %v15 = vld [vmem:[%s0] sm:$0xff]
    %vm16 = vcmask 261120
    %v17 = vsel %vm16, %v15, -inf
    %18 = vmax.xlane.f32.xlu0 %v17
    %v19 = vpop.xlane.xlu0 %18
    %v20 = vsub.f32 %v15, %v19
    %v21 = vmul.f32 %v20, 1.442695
    %v22 = vpow.pop %v21
    %v23 = vsub.f32 -inf, %v19
    %v24 = vmul.f32 %v23, 1.442695
    %v25 = vpow.pop %v24
    %v26 = vmul.f32 %v25, 0.0
    %v27 = vsel %vm16, %v22, 0.0
    %28 = vadd.xlane.f32.xlu0 %v27
    %v29 = vpop.xlane.xlu0 %28
    %v30 = vadd.f32 %v26, %v29
    %31 = vset.pattern.permute.xlu0 0
    %32 = vperm.xlu0 %31, %v12
    %v33 = vpop.permute.xlu0 %32
    %vm34 = vcmp.eq.s32.totalorder %v14, %v33
    %v35 = vsel %vm34, %v15, 0.0
    %v36 = vsel %vm16, %v35, 0.0
    %37 = vadd.xlane.f32.xlu0 %v36
    %v38 = vpop.xlane.xlu0 %37
    %v39 = vadd.f32 %v38, 0.0
    %v40 = vlog2.pop %v30
    %v41 = vmul.f32 %v40, 0.6931472
    %v42 = vadd.f32 %v19, %v41
    %v43 = vsub.f32 %v39, %v42
    %v44 = vmax.f32 %v43, -73.682724
    %v45 = vlaneseq
    %v46 = vshrl.u32 %v45, 7
    %s47 = smul.u32 0, 8
    %v48 = vstv %s47
    %v49 = vadd.s32 %v46, %v48
    %vm50 = vcmp.lt.s32.totalorder %v49, 8
    %v51 = vsel %vm50, %v44, 0.0
    %vm52 = vcmask 7168
    %v53 = vsel %vm52, %v51, 0.0
    %54 = vadd.xlane.f32.xlu0 %v53
    %v55 = vpop.xlane.xlu0 %54
    %v56 = vrot.slane %v55, 4
    %v57 = vadd.f32 %v55, %v56
    %v58 = vrot.slane %v57, 2
    %v59 = vadd.f32 %v57, %v58
    %v60 = vrot.slane %v59, 1
    %v61 = vadd.f32 %v59, %v60
    %s62 = vtos %v61
    %s63 = ssub.f32 0.0, %s62
    %vm64 = vcmp.eq.s32.totalorder %v46, 0
    %vm65 = vcmp.eq.s32.totalorder %v14, 0
    %vm66 = vmand %vm64, %vm65
    %v67 = vstv %s63
    %v68 = vsel %vm66, %v67, 0.0
    %69 = vst [vmem:[#allocation2] sm:$0xff] %v68
    // Predicated region
    $region10: #{tpu_custom_call.1} parent=1 // pred_check
      _
    $region11: #{tpu_custom_call.1} parent=1 // pred_check_branch
      %71 = sbr.rel (0) target = $region13
    $region12: #{tpu_custom_call.1} parent=1 // pred_region
      %s73 = ssub.s32 128, 128
      %74 = vsyncadd [#allocation3], %s73
      %s76 = sshll.u32 [#allocation2], 4
      %s77 = int_to_ptr.vmem [resolvable:$true] %s76
      %79 = dma.vmem_to_hbm [thread:$0]  %s77, 128, %s2, [#allocation3]
    $region13: #{tpu_custom_call.1} parent=1 // pred_fallthru
      _
    // Predicated region
    $region14: #{tpu_custom_call.1} parent=1 // pred_check
      _
    $region15: #{tpu_custom_call.1} parent=1 // pred_check_branch
      %81 = sbr.rel (0) target = $region17
    $region16: #{tpu_custom_call.1} parent=1 // pred_region
      %82 = dma.done [#allocation3], 128
    $region17: #{tpu_custom_call.1} parent=1 // pred_fallthru
      _
    %83 = vsyncpa [#allocation3], 1

</llo_original>
